<compile_context>
chip_gen: v5e
topology: v5e:2x2
jax: 0.10.0
libtpu: 0.0.40
codegen_flags: <defaults>
</compile_context>

<pallas_src>
import functools

import jax
import jax.numpy as jnp
from jax.experimental import pallas as pl
from jax.experimental.pallas import tpu as pltpu

EPS = 1e-5
_TILE_TARGET_BYTES = 2 << 20          # ~2 MiB activation tile per grid step


# ------------------------------ small helpers ------------------------------ #

def _vmem_limit():
    """Scoped-VMEM cap: ~3/4 of physical VMEM, capped at 100 MiB.

    -> ~96-100 MiB on v5e/v6e (128 MiB physical), ~48 MiB on v7x (64 MiB)."""
    try:
        phys = int(pltpu.get_tpu_info().vmem_capacity_bytes)
    except Exception:
        phys = 128 * 1024 * 1024
    return int(min(phys * 3 // 4, 100 * 1024 * 1024))


def _round_up(x, m):
    return (x + m - 1) // m * m


def _pad_dim(a, axis, size):
    if a.shape[axis] == size:
        return a
    widths = [(0, 0)] * a.ndim
    widths[axis] = (0, size - a.shape[axis])
    return jnp.pad(a, widths)


def _pick_tb(n, c, length, bytes_per_elem=4):
    """Largest batch-tile TB (divisor of n) whose (C, TB*L) tile fits the
    target and whose lane extent TB*L is 128-aligned or the full extent."""
    legal = [tb for tb in range(1, n + 1)
             if n % tb == 0 and (tb == n or (tb * length) % 128 == 0)]
    fit = [tb for tb in legal
           if tb * c * length * bytes_per_elem <= _TILE_TARGET_BYTES]
    return max(fit) if fit else min(legal)


def _compiler_params(semantics):
    return pltpu.CompilerParams(
        dimension_semantics=semantics,
        vmem_limit_bytes=_vmem_limit(),
    )


# ----------------------------- kernel helpers ------------------------------ #

def _conv3(x, w, length, matmul_dtype):
    """Conv1d(k=3, p=1, no bias) on a (Cin, M) slab of TB flattened samples.

    x: (Cin, M) with M = TB*L, samples concatenated on the lane axis.
    w: (Cout, 3*Cin) fused tap-major weights [k=0 | k=1 | k=2].
    Returns (Cout, M) f32 from a single MXU matmul.
    """
    _, m = x.shape
    pos = jax.lax.broadcasted_iota(jnp.int32, (1, m), 1) % length
    left_ok = (pos != 0).astype(x.dtype)             # zero x[l-1] at sample starts
    right_ok = (pos != length - 1).astype(x.dtype)   # zero x[l+1] at sample ends
    # jnp.roll keeps this portable (pltpu.roll(x, 1) / pltpu.roll(x, m-1) are
    # the native XLU forms; shifts must be non-negative there).
    x_m1 = jnp.roll(x, 1, axis=1) * left_ok
    x_p1 = jnp.roll(x, -1, axis=1) * right_ok
    # For 3*Cin well beyond MXU depth (~256) switch to three per-tap dots to
    # avoid the 3x cols slab; fused K is best at these channel counts.
    cols = jnp.concatenate([x_m1, x, x_p1], axis=0)  # (3*Cin, M)
    return jnp.dot(w.astype(matmul_dtype), cols.astype(matmul_dtype),
                   preferred_element_type=jnp.float32)


def _accumulate_stats(s_ref, y, step, tile_elems):
    """Accumulate per-channel running (sum, M2) with Chan's parallel update.

    Avoids E[x^2]-mean^2 cancellation; one extra VPU pass over the VMEM tile.
    s_ref: (C, 2) resident accumulator [running_sum | running_M2].
    """
    m = jnp.float32(tile_elems)
    t_sum = jnp.sum(y, axis=1, keepdims=True)                 # (C, 1)
    t_mean = t_sum / m
    d = y - t_mean
    t_m2 = jnp.sum(d * d, axis=1, keepdims=True)              # (C, 1)
    prev = s_ref[...]                                         # (C, 2)
    run_sum = prev[:, 0:1]
    run_m2 = prev[:, 1:2]
    n_a = step.astype(jnp.float32) * m                        # elems seen so far
    delta = t_mean - run_sum / jnp.maximum(n_a, 1.0)
    new_m2 = run_m2 + t_m2 + delta * delta * (n_a * m / (n_a + m))
    s_ref[...] = jnp.concatenate([run_sum + t_sum, new_m2], axis=1)


# -------------------------------- kernels ---------------------------------- #

def _conv_stats_kernel(x_ref, w_ref, y_ref, s_ref, *,
                       length, tile_elems, matmul_dtype):
    step = pl.program_id(0)

    @pl.when(step == 0)
    def _():
        s_ref[...] = jnp.zeros_like(s_ref)

    y = _conv3(x_ref[...], w_ref[...], length, matmul_dtype)
    y_ref[...] = y.astype(y_ref.dtype)
    _accumulate_stats(s_ref, y, step, tile_elems)


def _bn_relu_conv_stats_kernel(x_ref, sc_ref, sh_ref, w_ref, y_ref, s_ref, *,
                               length, tile_elems, matmul_dtype):
    step = pl.program_id(0)

    @pl.when(step == 0)
    def _():
        s_ref[...] = jnp.zeros_like(s_ref)

    h = jnp.maximum(x_ref[...] * sc_ref[...] + sh_ref[...], 0.0)
    y = _conv3(h, w_ref[...], length, matmul_dtype)
    y_ref[...] = y.astype(y_ref.dtype)
    _accumulate_stats(s_ref, y, step, tile_elems)


def _bn_relu_kernel(x_ref, sc_ref, sh_ref, o_ref):
    o_ref[...] = jnp.maximum(
        x_ref[...] * sc_ref[...] + sh_ref[...], 0.0).astype(o_ref.dtype)


# --------------------------- pallas_call wrappers --------------------------- #

def _conv_stats_call(xt, wf, n, length, matmul_dtype):
    ci, total = xt.shape
    co = wf.shape[0]
    tb = _pick_tb(n, max(ci, co), length)
    m = tb * length
    kernel = functools.partial(_conv_stats_kernel, length=length,
                               tile_elems=m, matmul_dtype=matmul_dtype)
    return pl.pallas_call(
        kernel,
        grid=(n // tb,),
        in_specs=[
            pl.BlockSpec((ci, m), lambda i: (0, i)),
            pl.BlockSpec((co, 3 * ci), lambda i: (0, 0)),
        ],
        out_specs=(
            pl.BlockSpec((co, m), lambda i: (0, i)),
            pl.BlockSpec((co, 2), lambda i: (0, 0)),      # resident accumulator
        ),
        out_shape=(
            jax.ShapeDtypeStruct((co, total), jnp.float32),
            jax.ShapeDtypeStruct((co, 2), jnp.float32),
        ),
        compiler_params=_compiler_params(("arbitrary",)),
        cost_estimate=pl.CostEstimate(
            flops=2 * total * 3 * ci * co + 4 * co * total,
            transcendentals=0,
            bytes_accessed=4 * (ci * total + 3 * ci * co + co * total + 2 * co),
        ),
    )(xt, wf)


def _bn_relu_conv_stats_call(xt, scale, shift, wf, n, length, matmul_dtype):
    ci, total = xt.shape
    co = wf.shape[0]
    tb = _pick_tb(n, max(ci, co), length)
    m = tb * length
    kernel = functools.partial(_bn_relu_conv_stats_kernel, length=length,
                               tile_elems=m, matmul_dtype=matmul_dtype)
    return pl.pallas_call(
        kernel,
        grid=(n // tb,),
        in_specs=[
            pl.BlockSpec((ci, m), lambda i: (0, i)),
            pl.BlockSpec((ci, 1), lambda i: (0, 0)),
            pl.BlockSpec((ci, 1), lambda i: (0, 0)),
            pl.BlockSpec((co, 3 * ci), lambda i: (0, 0)),
        ],
        out_specs=(
            pl.BlockSpec((co, m), lambda i: (0, i)),
            pl.BlockSpec((co, 2), lambda i: (0, 0)),      # resident accumulator
        ),
        out_shape=(
            jax.ShapeDtypeStruct((co, total), jnp.float32),
            jax.ShapeDtypeStruct((co, 2), jnp.float32),
        ),
        compiler_params=_compiler_params(("arbitrary",)),
        cost_estimate=pl.CostEstimate(
            flops=2 * total * 3 * ci * co + 3 * ci * total + 4 * co * total,
            transcendentals=0,
            bytes_accessed=4 * (ci * total + 2 * ci + 3 * ci * co
                                + co * total + 2 * co),
        ),
    )(xt, scale, shift, wf)


def _bn_relu_call(xt, scale, shift, n, length):
    c, total = xt.shape
    tb = _pick_tb(n, c, length)
    m = tb * length
    return pl.pallas_call(
        _bn_relu_kernel,
        grid=(n // tb,),
        in_specs=[
            pl.BlockSpec((c, m), lambda i: (0, i)),
            pl.BlockSpec((c, 1), lambda i: (0, 0)),
            pl.BlockSpec((c, 1), lambda i: (0, 0)),
        ],
        out_specs=pl.BlockSpec((c, m), lambda i: (0, i)),
        out_shape=jax.ShapeDtypeStruct((c, total), jnp.float32),
        input_output_aliases={0: 0},   # y2 is dead after this: write in place
        compiler_params=_compiler_params(("parallel",)),
        cost_estimate=pl.CostEstimate(
            flops=3 * c * total,
            transcendentals=0,
            bytes_accessed=4 * (2 * c * total + 2 * c),
        ),
    )(xt, scale, shift)


# ------------------------------ host-side glue ------------------------------ #

def _fold_bn(stats, count, gamma, beta):
    """stats: (C, 2) = [sum, M2] over N*L -> per-channel scale/shift (C, 1)."""
    mean = stats[:, 0] / count
    var = jnp.maximum(stats[:, 1] / count, 0.0)      # biased var (train-mode BN)
    scale = gamma * jax.lax.rsqrt(var + EPS)
    shift = beta - mean * scale
    return scale.reshape(-1, 1), shift.reshape(-1, 1)


def doubleconv_forward(x, params, matmul_dtype=jnp.float32):
    """x: (N, Cin, L) f32 -> (N, Cout, L) f32. PyTorch DoubleConv, train-mode BN."""
    w1, _b1, g1, be1, w2, _b2, g2, be2 = params   # conv biases cancel in train BN
    n, cin, length = x.shape
    cmid, cout = w1.shape[0], w2.shape[0]
    count = float(n * length)

    # Pad channel counts to multiples of 8 once (sublane alignment). Padded
    # channels are all-zero weights/gamma/beta -> exact zeros end-to-end.
    cin_p, cmid_p, cout_p = (_round_up(c, 8) for c in (cin, cmid, cout))
    xp = _pad_dim(x, 1, cin_p)
    w1p = _pad_dim(_pad_dim(w1, 0, cmid_p), 1, cin_p)
    w2p = _pad_dim(_pad_dim(w2, 0, cout_p), 1, cmid_p)
    g1p, be1p = _pad_dim(g1, 0, cmid_p), _pad_dim(be1, 0, cmid_p)
    g2p, be2p = _pad_dim(g2, 0, cout_p), _pad_dim(be2, 0, cout_p)

    # Channel-major layout (C, N*L): lane-dense outputs, one MXU matmul per
    # tile. One transpose in, one out; intermediates never leave this layout.
    xt = jnp.transpose(xp, (1, 0, 2)).reshape(cin_p, n * length)

    # Fuse taps: (Co, Ci, 3) -> tap-major (Co, 3*Ci) matching im2col rows.
    w1f = jnp.transpose(w1p, (0, 2, 1)).reshape(cmid_p, 3 * cin_p)
    w2f = jnp.transpose(w2p, (0, 2, 1)).reshape(cout_p, 3 * cmid_p)

    y1, s1 = _conv_stats_call(xt, w1f, n, length, matmul_dtype)
    sc1, sh1 = _fold_bn(s1, count, g1p, be1p)
    y2, s2 = _bn_relu_conv_stats_call(y1, sc1, sh1, w2f, n, length, matmul_dtype)
    sc2, sh2 = _fold_bn(s2, count, g2p, be2p)
    out = _bn_relu_call(y2, sc2, sh2, n, length)

    out = jnp.transpose(out.reshape(cout_p, n, length), (1, 0, 2))
    return out[:, :cout, :]


# ------------------------------- reference ---------------------------------- #

def reference(x, params):
    """Pure-JAX reference matching PyTorch DoubleConv (train-mode BN)."""
    w1, b1, g1, be1, w2, b2, g2, be2 = params

    def conv(inp, w, b):  # torch layout (Co, Ci, 3)
        y = jax.lax.conv_general_dilated(
            inp, w, window_strides=(1,), padding=((1, 1),),
            dimension_numbers=("NCH", "OIH", "NCH"))
        return y + b.reshape(1, -1, 1)

    def bn_relu(y, g, be):
        mean = jnp.mean(y, axis=(0, 2), keepdims=True)
        var = jnp.mean((y - mean) ** 2, axis=(0, 2), keepdims=True)
        yn = (y - mean) / jnp.sqrt(var + EPS)
        return jnp.maximum(yn * g.reshape(1, -1, 1) + be.reshape(1, -1, 1), 0.0)

    h = bn_relu(conv(x, w1, b1), g1, be1)
    return bn_relu(conv(h, w2, b2), g2, be2)


def make_params(key, in_channels, out_channels, mid_channels=None):
    if mid_channels is None:
        mid_channels = out_channels  # DoubleConv default: mid = out
    k1, k2, k3, k4 = jax.random.split(key, 4)
    s1 = 1.0 / (in_channels * 3) ** 0.5
    s2 = 1.0 / (mid_channels * 3) ** 0.5
    w1 = jax.random.uniform(k1, (mid_channels, in_channels, 3),
                            jnp.float32, -s1, s1)
    b1 = jax.random.uniform(k2, (mid_channels,), jnp.float32, -s1, s1)
    w2 = jax.random.uniform(k3, (out_channels, mid_channels, 3),
                            jnp.float32, -s2, s2)
    b2 = jax.random.uniform(k4, (out_channels,), jnp.float32, -s2, s2)
    g1 = jnp.ones((mid_channels,), jnp.float32)
    be1 = jnp.zeros((mid_channels,), jnp.float32)
    g2 = jnp.ones((out_channels,), jnp.float32)
    be2 = jnp.zeros((out_channels,), jnp.float32)
    return (w1, b1, g1, be1, w2, b2, g2, be2)


if __name__ == "__main__":
    N, Cin, Cout, L = 2, 4, 8, 16
    key = jax.random.PRNGKey(0)
    kx, kp = jax.random.split(key)
    x = jax.random.normal(kx, (N, Cin, L), jnp.float32)
    params = make_params(kp, Cin, Cout)

    ref = jax.block_until_ready(reference(x, params))

    # f32 MXU path: must match the reference tightly.
    fwd = jax.jit(doubleconv_forward)
    out = jax.block_until_ready(fwd(x, params))
    assert out.shape == (N, Cout, L), out.shape
    err = float(jnp.max(jnp.abs(out - ref)))
    assert jnp.allclose(out, ref, atol=1e-4, rtol=1e-4), err

    # bf16 MXU operands (perf path; f32 accumulation + f32 BN stats). Looser
    # tolerance per the review's correctness note on bf16 rounding.
    fwd_bf16 = jax.jit(functools.partial(doubleconv_forward,
                                         matmul_dtype=jnp.bfloat16))
    out_bf16 = jax.block_until_ready(fwd_bf16(x, params))
    err_bf16 = float(jnp.max(jnp.abs(out_bf16 - ref)))
    assert jnp.allclose(out_bf16, ref, atol=1e-1, rtol=1e-1), err_bf16

    print("KERNEL_OK")
</pallas_src>

<mosaic_0001>
module attributes {stable_mosaic.version = 11 : i64} {
  func.func @_conv_stats_kernel(%arg0: i32, %arg1: memref<8x32xf32, #tpu.memory_space<vmem>>, %arg2: memref<8x24xf32, #tpu.memory_space<vmem>>, %arg3: memref<8x32xf32, #tpu.memory_space<vmem>>, %arg4: memref<8x2xf32, #tpu.memory_space<vmem>>) attributes {dimension_semantics = [#tpu.dimension_semantics<arbitrary>], iteration_bounds = array<i64: 1>, scalar_prefetch = 0 : i64, scratch_operands = 0 : i64, tpu.core_type = #tpu.core_type<tc>, window_params = [{transform_indices = @transform_0, window_bounds = array<i64: 8, 32>}, {pipeline_mode = #tpu.pipeline_mode<synchronous>, transform_indices = @transform_1, window_bounds = array<i64: 8, 24>}, {transform_indices = @transform_2, window_bounds = array<i64: 8, 32>}, {pipeline_mode = #tpu.pipeline_mode<synchronous>, transform_indices = @transform_3, window_bounds = array<i64: 8, 2>}]} {
    %c0_i32 = arith.constant 0 : i32
    %0 = arith.cmpi eq, %arg0, %c0_i32 : i32
    %1 = arith.extui %0 : i1 to i32
    %c0_i32_0 = arith.constant 0 : i32
    %2 = arith.cmpi ne, %1, %c0_i32_0 : i32
    scf.if %2 {
      %cst_22 = arith.constant 0.000000e+00 : f32
      %72 = vector.broadcast %cst_22 : f32 to vector<8x2xf32>
      %c0_23 = arith.constant 0 : index
      %c0_24 = arith.constant 0 : index
      %73 = vector.load %arg4[%c0_23, %c0_24] : memref<8x2xf32, #tpu.memory_space<vmem>>, vector<8x2xf32>
      tpu.vector_store %arg4[%c0_23, %c0_24], %72 {strides = array<i32>} : memref<8x2xf32, #tpu.memory_space<vmem>>, vector<8x2xf32>,
    } else {
    }
    %c0 = arith.constant 0 : index
    %c0_1 = arith.constant 0 : index
    %3 = vector.load %arg1[%c0, %c0_1] : memref<8x32xf32, #tpu.memory_space<vmem>>, vector<8x32xf32>
    %c0_2 = arith.constant 0 : index
    %c0_3 = arith.constant 0 : index
    %4 = vector.load %arg2[%c0_2, %c0_3] : memref<8x24xf32, #tpu.memory_space<vmem>>, vector<8x24xf32>
    %5 = tpu.iota {dimensions = array<i32: 1>} : vector<1x32xi32>
    %c16_i32 = arith.constant 16 : i32
    %c0_i32_4 = arith.constant 0 : i32
    %6 = arith.cmpi eq, %c16_i32, %c0_i32_4 : i32
    %c1_i32 = arith.constant 1 : i32
    %7 = arith.select %6, %c1_i32, %c16_i32 : i32
    %8 = vector.broadcast %7 : i32 to vector<1x32xi32>
    %9 = arith.remsi %5, %8 : vector<1x32xi32>
    %c0_i32_5 = arith.constant 0 : i32
    %10 = vector.broadcast %c0_i32_5 : i32 to vector<1x32xi32>
    %11 = arith.cmpi ne, %9, %10 : vector<1x32xi32>
    %c0_i32_6 = arith.constant 0 : i32
    %12 = vector.broadcast %c0_i32_6 : i32 to vector<1x32xi32>
    %13 = arith.cmpi slt, %9, %12 : vector<1x32xi32>
    %c0_i32_7 = arith.constant 0 : i32
    %14 = arith.cmpi slt, %7, %c0_i32_7 : i32
    %15 = vector.broadcast %14 : i1 to vector<1x32xi1>
    %16 = vector.broadcast %15 : vector<1x32xi1> to vector<1x32xi1>
    %17 = arith.xori %13, %16 : vector<1x32xi1>
    %18 = arith.andi %17, %11 : vector<1x32xi1>
    %19 = vector.broadcast %7 : i32 to vector<1x32xi32>
    %20 = arith.addi %9, %19 : vector<1x32xi32>
    %21 = arith.select %18, %20, %9 : vector<1x32xi1>, vector<1x32xi32>
    %c0_i32_8 = arith.constant 0 : i32
    %22 = vector.broadcast %c0_i32_8 : i32 to vector<1x32xi32>
    %23 = arith.cmpi ne, %21, %22 : vector<1x32xi32>
    %24 = arith.extui %23 : vector<1x32xi1> to vector<1x32xi32>
    %25 = arith.sitofp %24 : vector<1x32xi32> to vector<1x32xf32>
    %c15_i32 = arith.constant 15 : i32
    %26 = vector.broadcast %c15_i32 : i32 to vector<1x32xi32>
    %27 = arith.cmpi ne, %21, %26 : vector<1x32xi32>
    %28 = arith.extui %27 : vector<1x32xi1> to vector<1x32xi32>
    %29 = arith.sitofp %28 : vector<1x32xi32> to vector<1x32xf32>
    %30 = vector.extract_strided_slice %3 {offsets = [0, 31], sizes = [8, 1], strides = [1, 1]} : vector<8x32xf32> to vector<8x1xf32>
    %31 = vector.extract_strided_slice %3 {offsets = [0, 0], sizes = [8, 31], strides = [1, 1]} : vector<8x32xf32> to vector<8x31xf32>
    %32 = tpu.concatenate %30, %31 in 1 : vector<8x1xf32>, vector<8x31xf32> -> vector<8x32xf32>
    %33 = vector.broadcast %25 : vector<1x32xf32> to vector<8x32xf32>
    %34 = arith.mulf %32, %33 : vector<8x32xf32>
    %35 = vector.extract_strided_slice %3 {offsets = [0, 1], sizes = [8, 31], strides = [1, 1]} : vector<8x32xf32> to vector<8x31xf32>
    %36 = vector.extract_strided_slice %3 {offsets = [0, 0], sizes = [8, 1], strides = [1, 1]} : vector<8x32xf32> to vector<8x1xf32>
    %37 = tpu.concatenate %35, %36 in 1 : vector<8x31xf32>, vector<8x1xf32> -> vector<8x32xf32>
    %38 = vector.broadcast %29 : vector<1x32xf32> to vector<8x32xf32>
    %39 = arith.mulf %37, %38 : vector<8x32xf32>
    %40 = tpu.concatenate %34, %3, %39 in 0 : vector<8x32xf32>, vector<8x32xf32>, vector<8x32xf32> -> vector<24x32xf32>
    %cst = arith.constant dense<0.000000e+00> : vector<8x32xf32>
    %41 = tpu.matmul %4, %40, %cst {dimension_numbers = #tpu.dot_dimension_numbers<[1], [0], [0], [1], [0, 0, 1, 1], [], []>} : vector<8x24xf32>, vector<24x32xf32>, vector<8x32xf32> -> vector<8x32xf32>
    %c0_9 = arith.constant 0 : index
    %c0_10 = arith.constant 0 : index
    %42 = vector.load %arg3[%c0_9, %c0_10] : memref<8x32xf32, #tpu.memory_space<vmem>>, vector<8x32xf32>
    tpu.vector_store %arg3[%c0_9, %c0_10], %41 {strides = array<i32>} : memref<8x32xf32, #tpu.memory_space<vmem>>, vector<8x32xf32>,
    %cst_11 = arith.constant dense<0.000000e+00> : vector<8xf32>
    %43 = vector.multi_reduction <add>, %41, %cst_11 [1] : vector<8x32xf32> to vector<8xf32>
    %44 = vector.shape_cast %43 : vector<8xf32> to vector<8x1xf32>
    %cst_12 = arith.constant 3.200000e+01 : f32
    %45 = vector.broadcast %cst_12 : f32 to vector<8x1xf32>
    %46 = arith.divf %44, %45 : vector<8x1xf32>
    %47 = vector.broadcast %46 : vector<8x1xf32> to vector<8x32xf32>
    %48 = arith.subf %41, %47 : vector<8x32xf32>
    %49 = arith.mulf %48, %48 : vector<8x32xf32>
    %cst_13 = arith.constant dense<0.000000e+00> : vector<8xf32>
    %50 = vector.multi_reduction <add>, %49, %cst_13 [1] : vector<8x32xf32> to vector<8xf32>
    %51 = vector.shape_cast %50 : vector<8xf32> to vector<8x1xf32>
    %c0_14 = arith.constant 0 : index
    %c0_15 = arith.constant 0 : index
    %52 = vector.load %arg4[%c0_14, %c0_15] : memref<8x2xf32, #tpu.memory_space<vmem>>, vector<8x2xf32>
    %53 = vector.extract_strided_slice %52 {offsets = [0, 0], sizes = [8, 1], strides = [1, 1]} : vector<8x2xf32> to vector<8x1xf32>
    %54 = vector.extract_strided_slice %52 {offsets = [0, 1], sizes = [8, 1], strides = [1, 1]} : vector<8x2xf32> to vector<8x1xf32>
    %55 = arith.sitofp %arg0 : i32 to f32
    %cst_16 = arith.constant 3.200000e+01 : f32
    %56 = arith.mulf %55, %cst_16 : f32
    %cst_17 = arith.constant 1.000000e+00 : f32
    %57 = arith.maximumf %56, %cst_17 : f32
    %58 = vector.broadcast %57 : f32 to vector<8x1xf32>
    %59 = arith.divf %53, %58 : vector<8x1xf32>
    %60 = arith.subf %46, %59 : vector<8x1xf32>
    %61 = arith.addf %54, %51 : vector<8x1xf32>
    %62 = arith.mulf %60, %60 : vector<8x1xf32>
    %cst_18 = arith.constant 3.200000e+01 : f32
    %63 = arith.mulf %56, %cst_18 : f32
    %cst_19 = arith.constant 3.200000e+01 : f32
    %64 = arith.addf %56, %cst_19 : f32
    %65 = arith.divf %63, %64 : f32
    %66 = vector.broadcast %65 : f32 to vector<8x1xf32>
    %67 = arith.mulf %62, %66 : vector<8x1xf32>
    %68 = arith.addf %61, %67 : vector<8x1xf32>
    %69 = arith.addf %53, %44 : vector<8x1xf32>
    %70 = tpu.concatenate %69, %68 in 1 : vector<8x1xf32>, vector<8x1xf32> -> vector<8x2xf32>
    %c0_20 = arith.constant 0 : index
    %c0_21 = arith.constant 0 : index
    %71 = vector.load %arg4[%c0_20, %c0_21] : memref<8x2xf32, #tpu.memory_space<vmem>>, vector<8x2xf32>
    tpu.vector_store %arg4[%c0_20, %c0_21], %70 {strides = array<i32>} : memref<8x2xf32, #tpu.memory_space<vmem>>, vector<8x2xf32>,
    return
  }
  func.func @transform_0(%arg0: i32) -> (i32, i32) {
    %c0_i32 = arith.constant 0 : i32
    %c0_i32_0 = arith.constant 0 : i32
    return %c0_i32, %arg0 : i32, i32
  }
  func.func @transform_1(%arg0: i32) -> (i32, i32) {
    %c0_i32 = arith.constant 0 : i32
    %c0_i32_0 = arith.constant 0 : i32
    %c0_i32_1 = arith.constant 0 : i32
    return %c0_i32, %c0_i32_0 : i32, i32
  }
  func.func @transform_2(%arg0: i32) -> (i32, i32) {
    %c0_i32 = arith.constant 0 : i32
    %c0_i32_0 = arith.constant 0 : i32
    return %c0_i32, %arg0 : i32, i32
  }
  func.func @transform_3(%arg0: i32) -> (i32, i32) {
    %c0_i32 = arith.constant 0 : i32
    %c0_i32_0 = arith.constant 0 : i32
    %c0_i32_1 = arith.constant 0 : i32
    return %c0_i32, %c0_i32_0 : i32, i32
  }
}

module attributes {stable_mosaic.version = 11 : i64} {
  func.func @_bn_relu_kernel(%arg0: i32, %arg1: memref<8x32xf32, #tpu.memory_space<vmem>>, %arg2: memref<8x1xf32, #tpu.memory_space<vmem>>, %arg3: memref<8x1xf32, #tpu.memory_space<vmem>>, %arg4: memref<8x32xf32, #tpu.memory_space<vmem>>) attributes {dimension_semantics = [#tpu.dimension_semantics<parallel>], iteration_bounds = array<i64: 1>, scalar_prefetch = 0 : i64, scratch_operands = 0 : i64, tpu.core_type = #tpu.core_type<tc>, window_params = [{transform_indices = @transform_0, window_bounds = array<i64: 8, 32>}, {pipeline_mode = #tpu.pipeline_mode<synchronous>, transform_indices = @transform_1, window_bounds = array<i64: 8, 1>}, {pipeline_mode = #tpu.pipeline_mode<synchronous>, transform_indices = @transform_2, window_bounds = array<i64: 8, 1>}, {transform_indices = @transform_3, window_bounds = array<i64: 8, 32>}]} {
    %c0 = arith.constant 0 : index
    %c0_0 = arith.constant 0 : index
    %0 = vector.load %arg1[%c0, %c0_0] : memref<8x32xf32, #tpu.memory_space<vmem>>, vector<8x32xf32>
    %c0_1 = arith.constant 0 : index
    %c0_2 = arith.constant 0 : index
    %1 = vector.load %arg2[%c0_1, %c0_2] : memref<8x1xf32, #tpu.memory_space<vmem>>, vector<8x1xf32>
    %2 = vector.broadcast %1 : vector<8x1xf32> to vector<8x32xf32>
    %3 = arith.mulf %0, %2 : vector<8x32xf32>
    %c0_3 = arith.constant 0 : index
    %c0_4 = arith.constant 0 : index
    %4 = vector.load %arg3[%c0_3, %c0_4] : memref<8x1xf32, #tpu.memory_space<vmem>>, vector<8x1xf32>
    %5 = vector.broadcast %4 : vector<8x1xf32> to vector<8x32xf32>
    %6 = arith.addf %3, %5 : vector<8x32xf32>
    %cst = arith.constant 0.000000e+00 : f32
    %7 = vector.broadcast %cst : f32 to vector<8x32xf32>
    %8 = arith.maximumf %6, %7 : vector<8x32xf32>
    %c0_5 = arith.constant 0 : index
    %c0_6 = arith.constant 0 : index
    %9 = vector.load %arg4[%c0_5, %c0_6] : memref<8x32xf32, #tpu.memory_space<vmem>>, vector<8x32xf32>
    tpu.vector_store %arg4[%c0_5, %c0_6], %8 {strides = array<i32>} : memref<8x32xf32, #tpu.memory_space<vmem>>, vector<8x32xf32>,
    return
  }
  func.func @transform_0(%arg0: i32) -> (i32, i32) {
    %c0_i32 = arith.constant 0 : i32
    %c0_i32_0 = arith.constant 0 : i32
    return %c0_i32, %arg0 : i32, i32
  }
  func.func @transform_1(%arg0: i32) -> (i32, i32) {
    %c0_i32 = arith.constant 0 : i32
    %c0_i32_0 = arith.constant 0 : i32
    %c0_i32_1 = arith.constant 0 : i32
    return %c0_i32, %c0_i32_0 : i32, i32
  }
  func.func @transform_2(%arg0: i32) -> (i32, i32) {
    %c0_i32 = arith.constant 0 : i32
    %c0_i32_0 = arith.constant 0 : i32
    %c0_i32_1 = arith.constant 0 : i32
    return %c0_i32, %c0_i32_0 : i32, i32
  }
  func.func @transform_3(%arg0: i32) -> (i32, i32) {
    %c0_i32 = arith.constant 0 : i32
    %c0_i32_0 = arith.constant 0 : i32
    return %c0_i32, %arg0 : i32, i32
  }
}

module attributes {stable_mosaic.version = 11 : i64} {
  func.func @_bn_relu_conv_stats_kernel(%arg0: i32, %arg1: memref<8x32xf32, #tpu.memory_space<vmem>>, %arg2: memref<8x1xf32, #tpu.memory_space<vmem>>, %arg3: memref<8x1xf32, #tpu.memory_space<vmem>>, %arg4: memref<8x24xf32, #tpu.memory_space<vmem>>, %arg5: memref<8x32xf32, #tpu.memory_space<vmem>>, %arg6: memref<8x2xf32, #tpu.memory_space<vmem>>) attributes {dimension_semantics = [#tpu.dimension_semantics<arbitrary>], iteration_bounds = array<i64: 1>, scalar_prefetch = 0 : i64, scratch_operands = 0 : i64, tpu.core_type = #tpu.core_type<tc>, window_params = [{transform_indices = @transform_0, window_bounds = array<i64: 8, 32>}, {pipeline_mode = #tpu.pipeline_mode<synchronous>, transform_indices = @transform_1, window_bounds = array<i64: 8, 1>}, {pipeline_mode = #tpu.pipeline_mode<synchronous>, transform_indices = @transform_2, window_bounds = array<i64: 8, 1>}, {pipeline_mode = #tpu.pipeline_mode<synchronous>, transform_indices = @transform_3, window_bounds = array<i64: 8, 24>}, {transform_indices = @transform_4, window_bounds = array<i64: 8, 32>}, {pipeline_mode = #tpu.pipeline_mode<synchronous>, transform_indices = @transform_5, window_bounds = array<i64: 8, 2>}]} {
    %c0_i32 = arith.constant 0 : i32
    %0 = arith.cmpi eq, %arg0, %c0_i32 : i32
    %1 = arith.extui %0 : i1 to i32
    %c0_i32_0 = arith.constant 0 : i32
    %2 = arith.cmpi ne, %1, %c0_i32_0 : i32
    scf.if %2 {
      %cst_27 = arith.constant 0.000000e+00 : f32
      %80 = vector.broadcast %cst_27 : f32 to vector<8x2xf32>
      %c0_28 = arith.constant 0 : index
      %c0_29 = arith.constant 0 : index
      %81 = vector.load %arg6[%c0_28, %c0_29] : memref<8x2xf32, #tpu.memory_space<vmem>>, vector<8x2xf32>
      tpu.vector_store %arg6[%c0_28, %c0_29], %80 {strides = array<i32>} : memref<8x2xf32, #tpu.memory_space<vmem>>, vector<8x2xf32>,
    } else {
    }
    %c0 = arith.constant 0 : index
    %c0_1 = arith.constant 0 : index
    %3 = vector.load %arg1[%c0, %c0_1] : memref<8x32xf32, #tpu.memory_space<vmem>>, vector<8x32xf32>
    %c0_2 = arith.constant 0 : index
    %c0_3 = arith.constant 0 : index
    %4 = vector.load %arg2[%c0_2, %c0_3] : memref<8x1xf32, #tpu.memory_space<vmem>>, vector<8x1xf32>
    %5 = vector.broadcast %4 : vector<8x1xf32> to vector<8x32xf32>
    %6 = arith.mulf %3, %5 : vector<8x32xf32>
    %c0_4 = arith.constant 0 : index
    %c0_5 = arith.constant 0 : index
    %7 = vector.load %arg3[%c0_4, %c0_5] : memref<8x1xf32, #tpu.memory_space<vmem>>, vector<8x1xf32>
    %8 = vector.broadcast %7 : vector<8x1xf32> to vector<8x32xf32>
    %9 = arith.addf %6, %8 : vector<8x32xf32>
    %cst = arith.constant 0.000000e+00 : f32
    %10 = vector.broadcast %cst : f32 to vector<8x32xf32>
    %11 = arith.maximumf %9, %10 : vector<8x32xf32>
    %c0_6 = arith.constant 0 : index
    %c0_7 = arith.constant 0 : index
    %12 = vector.load %arg4[%c0_6, %c0_7] : memref<8x24xf32, #tpu.memory_space<vmem>>, vector<8x24xf32>
    %13 = tpu.iota {dimensions = array<i32: 1>} : vector<1x32xi32>
    %c16_i32 = arith.constant 16 : i32
    %c0_i32_8 = arith.constant 0 : i32
    %14 = arith.cmpi eq, %c16_i32, %c0_i32_8 : i32
    %c1_i32 = arith.constant 1 : i32
    %15 = arith.select %14, %c1_i32, %c16_i32 : i32
    %16 = vector.broadcast %15 : i32 to vector<1x32xi32>
    %17 = arith.remsi %13, %16 : vector<1x32xi32>
    %c0_i32_9 = arith.constant 0 : i32
    %18 = vector.broadcast %c0_i32_9 : i32 to vector<1x32xi32>
    %19 = arith.cmpi ne, %17, %18 : vector<1x32xi32>
    %c0_i32_10 = arith.constant 0 : i32
    %20 = vector.broadcast %c0_i32_10 : i32 to vector<1x32xi32>
    %21 = arith.cmpi slt, %17, %20 : vector<1x32xi32>
    %c0_i32_11 = arith.constant 0 : i32
    %22 = arith.cmpi slt, %15, %c0_i32_11 : i32
    %23 = vector.broadcast %22 : i1 to vector<1x32xi1>
    %24 = vector.broadcast %23 : vector<1x32xi1> to vector<1x32xi1>
    %25 = arith.xori %21, %24 : vector<1x32xi1>
    %26 = arith.andi %25, %19 : vector<1x32xi1>
    %27 = vector.broadcast %15 : i32 to vector<1x32xi32>
    %28 = arith.addi %17, %27 : vector<1x32xi32>
    %29 = arith.select %26, %28, %17 : vector<1x32xi1>, vector<1x32xi32>
    %c0_i32_12 = arith.constant 0 : i32
    %30 = vector.broadcast %c0_i32_12 : i32 to vector<1x32xi32>
    %31 = arith.cmpi ne, %29, %30 : vector<1x32xi32>
    %32 = arith.extui %31 : vector<1x32xi1> to vector<1x32xi32>
    %33 = arith.sitofp %32 : vector<1x32xi32> to vector<1x32xf32>
    %c15_i32 = arith.constant 15 : i32
    %34 = vector.broadcast %c15_i32 : i32 to vector<1x32xi32>
    %35 = arith.cmpi ne, %29, %34 : vector<1x32xi32>
    %36 = arith.extui %35 : vector<1x32xi1> to vector<1x32xi32>
    %37 = arith.sitofp %36 : vector<1x32xi32> to vector<1x32xf32>
    %38 = vector.extract_strided_slice %11 {offsets = [0, 31], sizes = [8, 1], strides = [1, 1]} : vector<8x32xf32> to vector<8x1xf32>
    %39 = vector.extract_strided_slice %11 {offsets = [0, 0], sizes = [8, 31], strides = [1, 1]} : vector<8x32xf32> to vector<8x31xf32>
    %40 = tpu.concatenate %38, %39 in 1 : vector<8x1xf32>, vector<8x31xf32> -> vector<8x32xf32>
    %41 = vector.broadcast %33 : vector<1x32xf32> to vector<8x32xf32>
    %42 = arith.mulf %40, %41 : vector<8x32xf32>
    %43 = vector.extract_strided_slice %11 {offsets = [0, 1], sizes = [8, 31], strides = [1, 1]} : vector<8x32xf32> to vector<8x31xf32>
    %44 = vector.extract_strided_slice %11 {offsets = [0, 0], sizes = [8, 1], strides = [1, 1]} : vector<8x32xf32> to vector<8x1xf32>
    %45 = tpu.concatenate %43, %44 in 1 : vector<8x31xf32>, vector<8x1xf32> -> vector<8x32xf32>
    %46 = vector.broadcast %37 : vector<1x32xf32> to vector<8x32xf32>
    %47 = arith.mulf %45, %46 : vector<8x32xf32>
    %48 = tpu.concatenate %42, %11, %47 in 0 : vector<8x32xf32>, vector<8x32xf32>, vector<8x32xf32> -> vector<24x32xf32>
    %cst_13 = arith.constant dense<0.000000e+00> : vector<8x32xf32>
    %49 = tpu.matmul %12, %48, %cst_13 {dimension_numbers = #tpu.dot_dimension_numbers<[1], [0], [0], [1], [0, 0, 1, 1], [], []>} : vector<8x24xf32>, vector<24x32xf32>, vector<8x32xf32> -> vector<8x32xf32>
    %c0_14 = arith.constant 0 : index
    %c0_15 = arith.constant 0 : index
    %50 = vector.load %arg5[%c0_14, %c0_15] : memref<8x32xf32, #tpu.memory_space<vmem>>, vector<8x32xf32>
    tpu.vector_store %arg5[%c0_14, %c0_15], %49 {strides = array<i32>} : memref<8x32xf32, #tpu.memory_space<vmem>>, vector<8x32xf32>,
    %cst_16 = arith.constant dense<0.000000e+00> : vector<8xf32>
    %51 = vector.multi_reduction <add>, %49, %cst_16 [1] : vector<8x32xf32> to vector<8xf32>
    %52 = vector.shape_cast %51 : vector<8xf32> to vector<8x1xf32>
    %cst_17 = arith.constant 3.200000e+01 : f32
    %53 = vector.broadcast %cst_17 : f32 to vector<8x1xf32>
    %54 = arith.divf %52, %53 : vector<8x1xf32>
    %55 = vector.broadcast %54 : vector<8x1xf32> to vector<8x32xf32>
    %56 = arith.subf %49, %55 : vector<8x32xf32>
    %57 = arith.mulf %56, %56 : vector<8x32xf32>
    %cst_18 = arith.constant dense<0.000000e+00> : vector<8xf32>
    %58 = vector.multi_reduction <add>, %57, %cst_18 [1] : vector<8x32xf32> to vector<8xf32>
    %59 = vector.shape_cast %58 : vector<8xf32> to vector<8x1xf32>
    %c0_19 = arith.constant 0 : index
    %c0_20 = arith.constant 0 : index
    %60 = vector.load %arg6[%c0_19, %c0_20] : memref<8x2xf32, #tpu.memory_space<vmem>>, vector<8x2xf32>
    %61 = vector.extract_strided_slice %60 {offsets = [0, 0], sizes = [8, 1], strides = [1, 1]} : vector<8x2xf32> to vector<8x1xf32>
    %62 = vector.extract_strided_slice %60 {offsets = [0, 1], sizes = [8, 1], strides = [1, 1]} : vector<8x2xf32> to vector<8x1xf32>
    %63 = arith.sitofp %arg0 : i32 to f32
    %cst_21 = arith.constant 3.200000e+01 : f32
    %64 = arith.mulf %63, %cst_21 : f32
    %cst_22 = arith.constant 1.000000e+00 : f32
    %65 = arith.maximumf %64, %cst_22 : f32
    %66 = vector.broadcast %65 : f32 to vector<8x1xf32>
    %67 = arith.divf %61, %66 : vector<8x1xf32>
    %68 = arith.subf %54, %67 : vector<8x1xf32>
    %69 = arith.addf %62, %59 : vector<8x1xf32>
    %70 = arith.mulf %68, %68 : vector<8x1xf32>
    %cst_23 = arith.constant 3.200000e+01 : f32
    %71 = arith.mulf %64, %cst_23 : f32
    %cst_24 = arith.constant 3.200000e+01 : f32
    %72 = arith.addf %64, %cst_24 : f32
    %73 = arith.divf %71, %72 : f32
    %74 = vector.broadcast %73 : f32 to vector<8x1xf32>
    %75 = arith.mulf %70, %74 : vector<8x1xf32>
    %76 = arith.addf %69, %75 : vector<8x1xf32>
    %77 = arith.addf %61, %52 : vector<8x1xf32>
    %78 = tpu.concatenate %77, %76 in 1 : vector<8x1xf32>, vector<8x1xf32> -> vector<8x2xf32>
    %c0_25 = arith.constant 0 : index
    %c0_26 = arith.constant 0 : index
    %79 = vector.load %arg6[%c0_25, %c0_26] : memref<8x2xf32, #tpu.memory_space<vmem>>, vector<8x2xf32>
    tpu.vector_store %arg6[%c0_25, %c0_26], %78 {strides = array<i32>} : memref<8x2xf32, #tpu.memory_space<vmem>>, vector<8x2xf32>,
    return
  }
  func.func @transform_0(%arg0: i32) -> (i32, i32) {
    %c0_i32 = arith.constant 0 : i32
    %c0_i32_0 = arith.constant 0 : i32
    return %c0_i32, %arg0 : i32, i32
  }
  func.func @transform_1(%arg0: i32) -> (i32, i32) {
    %c0_i32 = arith.constant 0 : i32
    %c0_i32_0 = arith.constant 0 : i32
    %c0_i32_1 = arith.constant 0 : i32
    return %c0_i32, %c0_i32_0 : i32, i32
  }
  func.func @transform_2(%arg0: i32) -> (i32, i32) {
    %c0_i32 = arith.constant 0 : i32
    %c0_i32_0 = arith.constant 0 : i32
    %c0_i32_1 = arith.constant 0 : i32
    return %c0_i32, %c0_i32_0 : i32, i32
  }
  func.func @transform_3(%arg0: i32) -> (i32, i32) {
    %c0_i32 = arith.constant 0 : i32
    %c0_i32_0 = arith.constant 0 : i32
    %c0_i32_1 = arith.constant 0 : i32
    return %c0_i32, %c0_i32_0 : i32, i32
  }
  func.func @transform_4(%arg0: i32) -> (i32, i32) {
    %c0_i32 = arith.constant 0 : i32
    %c0_i32_0 = arith.constant 0 : i32
    return %c0_i32, %arg0 : i32, i32
  }
  func.func @transform_5(%arg0: i32) -> (i32, i32) {
    %c0_i32 = arith.constant 0 : i32
    %c0_i32_0 = arith.constant 0 : i32
    %c0_i32_1 = arith.constant 0 : i32
    return %c0_i32, %c0_i32_0 : i32, i32
  }
}

</mosaic_0001>

<llo_original>
// kernel: doubleconv_forward.5
$region0: #{doubleconv_forward.5}
  #allocation0 [shape = 'u32[]', space=smem, size = 0x4, offset = 0x4, fixed_abs, tag = 'smem constant byte address 0x4 - core index']
  #allocation1 [shape = 'u32[72,128]{1,0:T(1,128)}', space=vmem, size = 0x9000, scoped, tag = 'internal scratch']
  %s0 = inlined_call_operand.vmem [shape: f32[8,32], index: 0, kind: input, shape index: {}, may-alias: {0,3}]
  %s1 = inlined_call_operand.vmem [shape: f32[8,1], index: 1, kind: input, shape index: {}]
  %s2 = inlined_call_operand.vmem [shape: f32[8,1], index: 2, kind: input, shape index: {}]
  %s3 = inlined_call_operand.vmem [shape: f32[8,32], index: 3, kind: output, shape index: {}, may-alias: {0,3}]
  %s4 = sld [smem:[#allocation0]]
  $region22: #{doubleconv_forward.5} parent=0
    _
  %s6 = ssub.s32 1, %s4
  %s7 = scalar_select 0, %s6, %s4
  // Predicated region
  $region2: #{doubleconv_forward.5} parent=0 // pred_check
    _
  $region3: #{doubleconv_forward.5} parent=0 // pred_check_branch
    %9 = sbr.rel (0) target = $region5
  $region4: #{doubleconv_forward.5} parent=0 // pred_region
    _
  $region5: #{doubleconv_forward.5} parent=0 // pred_fallthru
    _
  // Predicated region
  $region6: #{doubleconv_forward.5} parent=0 // pred_check
    _
  $region7: #{doubleconv_forward.5} parent=0 // pred_check_branch
    %11 = sbr.rel (0) target = $region9
  $region8: #{doubleconv_forward.5} parent=0 // pred_region
    _
  $region9: #{doubleconv_forward.5} parent=0 // pred_fallthru
    _
  // Predicated region
  $region10: #{doubleconv_forward.5} parent=0 // pred_check
    _
  $region11: #{doubleconv_forward.5} parent=0 // pred_check_branch
    %13 = sbr.rel (0) target = $region13
  $region12: #{doubleconv_forward.5} parent=0 // pred_region
    _
  $region13: #{doubleconv_forward.5} parent=0 // pred_fallthru
    _
  %v14 = vld [vmem:[%s0] sm:$0xff]
  %v15 = vld [vmem:[%s1] sm:$0xff]
  %17 = vset.pattern.permute.xlu0 0
  %18 = vperm.xlu0 %17, %v15
  %v19 = vpop.permute.xlu0 %18
  %v21 = vmul.f32 %v14, %v19
  %v22 = vld [vmem:[%s2] sm:$0xff]
  %24 = vset.pattern.permute.xlu0 0
  %25 = vperm.xlu0 %24, %v22
  %v26 = vpop.permute.xlu0 %25
  %v28 = vadd.f32 %v21, %v26
  %v29 = vmax.f32 %v28, 0.0
  %vm30 = vcmask 261120
  %31 = vst.msk [vmem:[%s3] sm:$0xff] %vm30, %v29
  // Predicated region
  $region14: #{doubleconv_forward.5} parent=0 // pred_check
    _
  $region15: #{doubleconv_forward.5} parent=0 // pred_check_branch
    %33 = sbr.rel (0) target = $region17
  $region16: #{doubleconv_forward.5} parent=0 // pred_region
    _
  $region17: #{doubleconv_forward.5} parent=0 // pred_fallthru
    _
  // Predicated region
  $region18: #{doubleconv_forward.5} parent=0 // pred_check
    _
  $region19: #{doubleconv_forward.5} parent=0 // pred_check_branch
    %35 = sbr.rel (0) target = $region21
  $region20: #{doubleconv_forward.5} parent=0 // pred_region
    _
  $region21: #{doubleconv_forward.5} parent=0 // pred_fallthru
    _

// kernel: doubleconv_forward.3
$region0: #{doubleconv_forward.3}
  #allocation0 [shape = 'u32[]', space=smem, size = 0x4, offset = 0x4, fixed_abs, tag = 'smem constant byte address 0x4 - core index']
  #allocation1 [shape = 'u32[72,128]{1,0:T(1,128)}', space=vmem, size = 0x9000, scoped, tag = 'internal scratch']
  %s0 = inlined_call_operand.vmem [shape: f32[8,32], index: 0, kind: input, shape index: {}]
  %s1 = inlined_call_operand.vmem [shape: f32[8,24], index: 1, kind: input, shape index: {}]
  %s2 = inlined_call_operand.vmem [shape: f32[8,32], index: 2, kind: output, shape index: {0}]
  %s3 = inlined_call_operand.vmem [shape: f32[8,2], index: 3, kind: output, shape index: {1}]
  %4 = xla_tuple %s2, %s3
  %s5 = sld [smem:[#allocation0]]
  $region30: #{doubleconv_forward.3} parent=0
    _
  %s7 = ssub.s32 1, %s5
  %s8 = scalar_select 0, %s7, %s5
  // Predicated region
  $region2: #{doubleconv_forward.3} parent=0 // pred_check
    _
  $region3: #{doubleconv_forward.3} parent=0 // pred_check_branch
    %10 = sbr.rel (0) target = $region5
  $region4: #{doubleconv_forward.3} parent=0 // pred_region
    _
  $region5: #{doubleconv_forward.3} parent=0 // pred_fallthru
    _
  // Predicated region
  $region6: #{doubleconv_forward.3} parent=0 // pred_check
    _
  $region7: #{doubleconv_forward.3} parent=0 // pred_check_branch
    %12 = sbr.rel (0) target = $region9
  $region8: #{doubleconv_forward.3} parent=0 // pred_region
    _
  $region9: #{doubleconv_forward.3} parent=0 // pred_fallthru
    _
  %p13 = scmp.eq.s32.totalorder 0, 0
  // Predicated region
  $region10: #{doubleconv_forward.3} parent=0 // pred_check
    %p14 = pneg %p13
  $region11: #{doubleconv_forward.3} parent=0 // pred_check_branch
    %16 = sbr.rel (%p14) target = $region13
  $region12: #{doubleconv_forward.3} parent=0 // pred_region
    %vm17 = vcmask 15360
    %18 = vst.msk [vmem:[%s3] sm:$0xff] %vm17, 0.0
  $region13: #{doubleconv_forward.3} parent=0 // pred_fallthru
    _
  %v19 = vld [vmem:[%s0] sm:$0xff]
  %v20 = vld [vmem:[%s1] sm:$0xff]
  %v21 = vlaneseq
  %v22 = vand.u32 %v21, 127
  %vm23 = vcmp.lt.s32.totalorder %v22, 0
  %v24 = vsub.s32 0, %v22
  %v25 = vsel %vm23, %v24, %v22
  %v26 = vshrl.u32 %v25, 4
  %v27 = vand.u32 %v25, 15
  %v28 = vsub.s32 0, %v27
  %v29 = vsel %vm23, %v28, %v27
  %vm30 = vcmp.ne.s32.totalorder %v29, 0
  %vm31 = vcmp.lt.s32.totalorder %v29, 0
  %vm32 = vmand %vm31, %vm30
  %v33 = vadd.s32 %v29, 16
  %v34 = vsel %vm32, %v33, %v29
  %vm35 = vcmp.ne.s32.totalorder %v34, 0
  %v36 = vsel %vm35, 1, 0
  %v37 = vcvt.s32.f32 %v36
  %vm38 = vcmp.ne.s32.totalorder %v34, 15
  %v39 = vsel %vm38, 1, 0
  %v40 = vcvt.s32.f32 %v39
  %42 = vrot.lane.b32.xlu0 %v19, 97
  %v43 = vpop.permute.xlu0 %42
  %45 = vrot.lane.b32.xlu0 %v19, 1
  %v46 = vpop.permute.xlu0 %45
  %vm48 = vcmask 7168
  %v49 = vsel %vm48, %v43, %v46
  %v50 = vmul.f32 %v49, %v37
  %51 = vrot.lane.b32.xlu0 %v19, 127
  %v52 = vpop.permute.xlu0 %51
  %54 = vrot.lane.b32.xlu0 %v19, 31
  %v55 = vpop.permute.xlu0 %54
  %vm57 = vcmask 252928
  %v58 = vsel %vm57, %v52, %v55
  %v59 = vmul.f32 %v58, %v40
  %vm60 = vcmask 195584
  %v62 = vsel %vm60, %v20, 0
  %64 = vmatpush.msra.mxu0 0.0
  %65 = vmatpush.msra.mxu0 0.0
  %66 = vmatpush.msra.mxu0 0.0
  %67 = vmatpush.msra.mxu0 0.0
  %68 = vmatpush.msra.mxu0 0.0
  %69 = vmatpush.msra.mxu0 0.0
  %70 = vmatpush.msra.mxu0 0.0
  %71 = vmatpush.msra.mxu0 0.0
  %72 = vmatpush.msra.mxu0 0.0
  %73 = vmatpush.msra.mxu0 0.0
  %74 = vmatpush.msra.mxu0 0.0
  %75 = vmatpush.msra.mxu0 0.0
  %76 = vmatpush.msra.mxu0 0.0
  %77 = vmatpush.msra.mxu0 %v59
  %78 = vmatpush.msra.mxu0 %v19
  %79 = vmatpush.msra.mxu0 %v50
  %80 = vmatmul.f32.gmra.mxu0 %v62
  %v81 = vpop.f32.mrf.mxu0
  %v82 = vadd.f32 0.0, %v81
  %83 = vdwg.mxu0
  %vm84 = vcmask 261120
  %85 = vst.msk [vmem:[%s2] sm:$0xff] %vm84, %v82
  %v86 = vsel %vm84, %v82, 0.0
  %87 = vadd.xlane.f32.xlu0 %v86
  %v88 = vpop.xlane.xlu0 %87
  %v89 = vrcp.pop 32.0
  %v90 = vmul.f32 32.0, %v89
  %v91 = vsub.f32 1.0, %v90
  %v92 = vmul.f32 %v89, %v91
  %v93 = vadd.f32 %v89, %v92
  %vm94 = vweird.f32 %v89
  %v95 = vsel %vm94, %v89, %v93
  %v96 = vmul.f32 %v88, %v95
  %v97 = vsub.f32 %v82, %v96
  %v98 = vmul.f32 %v97, %v97
  %v99 = vsel %vm84, %v98, 0.0
  %100 = vadd.xlane.f32.xlu0 %v99
  %v101 = vpop.xlane.xlu0 %100
  %v102 = vld [vmem:[%s3] sm:$0xff]
  %s103 = scvt.s32.f32 0
  %s104 = smul.f32 %s103, 32.0
  %s105 = smax.f32 %s104, 1.0
  %v106 = vstv %s105
  %v107 = vrcp.pop %v106
  %v108 = vmul.f32 %v106, %v107
  %v109 = vsub.f32 1.0, %v108
  %v110 = vmul.f32 %v107, %v109
  %v111 = vadd.f32 %v107, %v110
  %vm112 = vweird.f32 %v106
  %vm113 = vweird.f32 %v107
  %vm114 = vmor %vm112, %vm113
  %v115 = vsel %vm114, %v107, %v111
  %v116 = vand.u32 2147483647, %v106
  %vm117 = vcmp.eq.f32.partialorder %v116, 8.507059e+37
  %v118 = vand.u32 %v106, 2147483648
  %v119 = vor.u32 1.1754944e-38, %v118
  %v120 = vsel %vm117, %v119, %v115
  %v121 = vmul.f32 %v102, %v120
  %v122 = vsub.f32 %v96, %v121
  %v123 = vadd.f32 %v102, %v101
  %v124 = vmul.f32 %v122, %v122
  %s125 = smul.f32 %s104, 32.0
  %s126 = sadd.f32 %s104, 32.0
  %v127 = vstv %s126
  %v128 = vrcp.pop %v127
  %v129 = vmul.f32 %v127, %v128
  %v130 = vsub.f32 1.0, %v129
  %v131 = vmul.f32 %v128, %v130
  %v132 = vadd.f32 %v128, %v131
  %vm133 = vweird.f32 %v127
  %vm134 = vweird.f32 %v128
  %vm135 = vmor %vm133, %vm134
  %v136 = vsel %vm135, %v128, %v132
  %v137 = vand.u32 2147483647, %v127
  %vm138 = vcmp.eq.f32.partialorder %v137, 8.507059e+37
  %v139 = vand.u32 %v127, 2147483648
  %v140 = vor.u32 1.1754944e-38, %v139
  %v141 = vsel %vm138, %v140, %v136
  %s142 = vtos %v141
  %s143 = smul.f32 %s125, %s142
  %v144 = vstv %s143
  %v145 = vmul.f32 %v124, %v144
  %147 = vrot.lane.b32.xlu0 %v145, 1
  %v148 = vpop.permute.xlu0 %147
  %v150 = vadd.f32 %v123, %v148
  %v151 = vadd.f32 %v102, %v88
  %v152 = vsel %vm48, %v151, %v150
  %vm153 = vcmask 15360
  %154 = vst.msk [vmem:[%s3] sm:$0xff] %vm153, %v152
  // Predicated region
  $region14: #{doubleconv_forward.3} parent=0 // pred_check
    _
  $region15: #{doubleconv_forward.3} parent=0 // pred_check_branch
    %156 = sbr.rel (0) target = $region17
  $region16: #{doubleconv_forward.3} parent=0 // pred_region
    _
  $region17: #{doubleconv_forward.3} parent=0 // pred_fallthru
    _
  // Predicated region
  $region18: #{doubleconv_forward.3} parent=0 // pred_check
    _
  $region19: #{doubleconv_forward.3} parent=0 // pred_check_branch
    %158 = sbr.rel (0) target = $region21
  $region20: #{doubleconv_forward.3} parent=0 // pred_region
    _
  $region21: #{doubleconv_forward.3} parent=0 // pred_fallthru
    _
  // Predicated region
  $region22: #{doubleconv_forward.3} parent=0 // pred_check
    _
  $region23: #{doubleconv_forward.3} parent=0 // pred_check_branch
    %160 = sbr.rel (0) target = $region25
  $region24: #{doubleconv_forward.3} parent=0 // pred_region
    _
  $region25: #{doubleconv_forward.3} parent=0 // pred_fallthru
    _
  // Predicated region
  $region26: #{doubleconv_forward.3} parent=0 // pred_check
    _
  $region27: #{doubleconv_forward.3} parent=0 // pred_check_branch
    %162 = sbr.rel (0) target = $region29
  $region28: #{doubleconv_forward.3} parent=0 // pred_region
    _
  $region29: #{doubleconv_forward.3} parent=0 // pred_fallthru
    _

// kernel: doubleconv_forward.4
$region0: #{doubleconv_forward.4}
  #allocation0 [shape = 'u32[]', space=smem, size = 0x4, offset = 0x4, fixed_abs, tag = 'smem constant byte address 0x4 - core index']
  #allocation1 [shape = 'u32[72,128]{1,0:T(1,128)}', space=vmem, size = 0x9000, scoped, tag = 'internal scratch']
  %s0 = inlined_call_operand.vmem [shape: f32[8,32], index: 0, kind: input, shape index: {}]
  %s1 = inlined_call_operand.vmem [shape: f32[8,1], index: 1, kind: input, shape index: {}]
  %s2 = inlined_call_operand.vmem [shape: f32[8,1], index: 2, kind: input, shape index: {}]
  %s3 = inlined_call_operand.vmem [shape: f32[8,24], index: 3, kind: input, shape index: {}]
  %s4 = inlined_call_operand.vmem [shape: f32[8,32], index: 4, kind: output, shape index: {0}]
  %s5 = inlined_call_operand.vmem [shape: f32[8,2], index: 5, kind: output, shape index: {1}]
  %6 = xla_tuple %s4, %s5
  %s7 = sld [smem:[#allocation0]]
  $region38: #{doubleconv_forward.4} parent=0
    _
  %s9 = ssub.s32 1, %s7
  %s10 = scalar_select 0, %s9, %s7
  // Predicated region
  $region2: #{doubleconv_forward.4} parent=0 // pred_check
    _
  $region3: #{doubleconv_forward.4} parent=0 // pred_check_branch
    %12 = sbr.rel (0) target = $region5
  $region4: #{doubleconv_forward.4} parent=0 // pred_region
    _
  $region5: #{doubleconv_forward.4} parent=0 // pred_fallthru
    _
  // Predicated region
  $region6: #{doubleconv_forward.4} parent=0 // pred_check
    _
  $region7: #{doubleconv_forward.4} parent=0 // pred_check_branch
    %14 = sbr.rel (0) target = $region9
  $region8: #{doubleconv_forward.4} parent=0 // pred_region
    _
  $region9: #{doubleconv_forward.4} parent=0 // pred_fallthru
    _
  // Predicated region
  $region10: #{doubleconv_forward.4} parent=0 // pred_check
    _
  $region11: #{doubleconv_forward.4} parent=0 // pred_check_branch
    %16 = sbr.rel (0) target = $region13
  $region12: #{doubleconv_forward.4} parent=0 // pred_region
    _
  $region13: #{doubleconv_forward.4} parent=0 // pred_fallthru
    _
  // Predicated region
  $region14: #{doubleconv_forward.4} parent=0 // pred_check
    _
  $region15: #{doubleconv_forward.4} parent=0 // pred_check_branch
    %18 = sbr.rel (0) target = $region17
  $region16: #{doubleconv_forward.4} parent=0 // pred_region
    _
  $region17: #{doubleconv_forward.4} parent=0 // pred_fallthru
    _
  %p19 = scmp.eq.s32.totalorder 0, 0
  // Predicated region
  $region18: #{doubleconv_forward.4} parent=0 // pred_check
    %p20 = pneg %p19
  $region19: #{doubleconv_forward.4} parent=0 // pred_check_branch
    %22 = sbr.rel (%p20) target = $region21
  $region20: #{doubleconv_forward.4} parent=0 // pred_region
    %vm23 = vcmask 15360
    %24 = vst.msk [vmem:[%s5] sm:$0xff] %vm23, 0.0
  $region21: #{doubleconv_forward.4} parent=0 // pred_fallthru
    _
  %v25 = vld [vmem:[%s0] sm:$0xff]
  %v26 = vld [vmem:[%s1] sm:$0xff]
  %28 = vset.pattern.permute.xlu0 0
  %29 = vperm.xlu0 %28, %v26
  %v30 = vpop.permute.xlu0 %29
  %v32 = vmul.f32 %v25, %v30
  %v33 = vld [vmem:[%s2] sm:$0xff]
  %35 = vset.pattern.permute.xlu0 0
  %36 = vperm.xlu0 %35, %v33
  %v37 = vpop.permute.xlu0 %36
  %v39 = vadd.f32 %v32, %v37
  %v40 = vmax.f32 %v39, 0.0
  %v41 = vld [vmem:[%s3] sm:$0xff]
  %v42 = vlaneseq
  %v43 = vand.u32 %v42, 127
  %vm44 = vcmp.lt.s32.totalorder %v43, 0
  %v45 = vsub.s32 0, %v43
  %v46 = vsel %vm44, %v45, %v43
  %v47 = vshrl.u32 %v46, 4
  %v48 = vand.u32 %v46, 15
  %v49 = vsub.s32 0, %v48
  %v50 = vsel %vm44, %v49, %v48
  %vm51 = vcmp.ne.s32.totalorder %v50, 0
  %vm52 = vcmp.lt.s32.totalorder %v50, 0
  %vm53 = vmand %vm52, %vm51
  %v54 = vadd.s32 %v50, 16
  %v55 = vsel %vm53, %v54, %v50
  %vm56 = vcmp.ne.s32.totalorder %v55, 0
  %v57 = vsel %vm56, 1, 0
  %v58 = vcvt.s32.f32 %v57
  %vm59 = vcmp.ne.s32.totalorder %v55, 15
  %v60 = vsel %vm59, 1, 0
  %v61 = vcvt.s32.f32 %v60
  %63 = vrot.lane.b32.xlu0 %v40, 97
  %v64 = vpop.permute.xlu0 %63
  %66 = vrot.lane.b32.xlu0 %v40, 1
  %v67 = vpop.permute.xlu0 %66
  %vm69 = vcmask 7168
  %v70 = vsel %vm69, %v64, %v67
  %v71 = vmul.f32 %v70, %v58
  %72 = vrot.lane.b32.xlu0 %v40, 127
  %v73 = vpop.permute.xlu0 %72
  %75 = vrot.lane.b32.xlu0 %v40, 31
  %v76 = vpop.permute.xlu0 %75
  %vm78 = vcmask 252928
  %v79 = vsel %vm78, %v73, %v76
  %v80 = vmul.f32 %v79, %v61
  %vm81 = vcmask 195584
  %v83 = vsel %vm81, %v41, 0
  %85 = vmatpush.msra.mxu0 0.0
  %86 = vmatpush.msra.mxu0 0.0
  %87 = vmatpush.msra.mxu0 0.0
  %88 = vmatpush.msra.mxu0 0.0
  %89 = vmatpush.msra.mxu0 0.0
  %90 = vmatpush.msra.mxu0 0.0
  %91 = vmatpush.msra.mxu0 0.0
  %92 = vmatpush.msra.mxu0 0.0
  %93 = vmatpush.msra.mxu0 0.0
  %94 = vmatpush.msra.mxu0 0.0
  %95 = vmatpush.msra.mxu0 0.0
  %96 = vmatpush.msra.mxu0 0.0
  %97 = vmatpush.msra.mxu0 0.0
  %98 = vmatpush.msra.mxu0 %v80
  %99 = vmatpush.msra.mxu0 %v40
  %100 = vmatpush.msra.mxu0 %v71
  %101 = vmatmul.f32.gmra.mxu0 %v83
  %v102 = vpop.f32.mrf.mxu0
  %v103 = vadd.f32 0.0, %v102
  %104 = vdwg.mxu0
  %vm105 = vcmask 261120
  %106 = vst.msk [vmem:[%s4] sm:$0xff] %vm105, %v103
  %v107 = vsel %vm105, %v103, 0.0
  %108 = vadd.xlane.f32.xlu0 %v107
  %v109 = vpop.xlane.xlu0 %108
  %v110 = vrcp.pop 32.0
  %v111 = vmul.f32 32.0, %v110
  %v112 = vsub.f32 1.0, %v111
  %v113 = vmul.f32 %v110, %v112
  %v114 = vadd.f32 %v110, %v113
  %vm115 = vweird.f32 %v110
  %v116 = vsel %vm115, %v110, %v114
  %v117 = vmul.f32 %v109, %v116
  %v118 = vsub.f32 %v103, %v117
  %v119 = vmul.f32 %v118, %v118
  %v120 = vsel %vm105, %v119, 0.0
  %121 = vadd.xlane.f32.xlu0 %v120
  %v122 = vpop.xlane.xlu0 %121
  %v123 = vld [vmem:[%s5] sm:$0xff]
  %s124 = scvt.s32.f32 0
  %s125 = smul.f32 %s124, 32.0
  %s126 = smax.f32 %s125, 1.0
  %v127 = vstv %s126
  %v128 = vrcp.pop %v127
  %v129 = vmul.f32 %v127, %v128
  %v130 = vsub.f32 1.0, %v129
  %v131 = vmul.f32 %v128, %v130
  %v132 = vadd.f32 %v128, %v131
  %vm133 = vweird.f32 %v127
  %vm134 = vweird.f32 %v128
  %vm135 = vmor %vm133, %vm134
  %v136 = vsel %vm135, %v128, %v132
  %v137 = vand.u32 2147483647, %v127
  %vm138 = vcmp.eq.f32.partialorder %v137, 8.507059e+37
  %v139 = vand.u32 %v127, 2147483648
  %v140 = vor.u32 1.1754944e-38, %v139
  %v141 = vsel %vm138, %v140, %v136
  %v142 = vmul.f32 %v123, %v141
  %v143 = vsub.f32 %v117, %v142
  %v144 = vadd.f32 %v123, %v122
  %v145 = vmul.f32 %v143, %v143
  %s146 = smul.f32 %s125, 32.0
  %s147 = sadd.f32 %s125, 32.0
  %v148 = vstv %s147
  %v149 = vrcp.pop %v148
  %v150 = vmul.f32 %v148, %v149
  %v151 = vsub.f32 1.0, %v150
  %v152 = vmul.f32 %v149, %v151
  %v153 = vadd.f32 %v149, %v152
  %vm154 = vweird.f32 %v148
  %vm155 = vweird.f32 %v149
  %vm156 = vmor %vm154, %vm155
  %v157 = vsel %vm156, %v149, %v153
  %v158 = vand.u32 2147483647, %v148
  %vm159 = vcmp.eq.f32.partialorder %v158, 8.507059e+37
  %v160 = vand.u32 %v148, 2147483648
  %v161 = vor.u32 1.1754944e-38, %v160
  %v162 = vsel %vm159, %v161, %v157
  %s163 = vtos %v162
  %s164 = smul.f32 %s146, %s163
  %v165 = vstv %s164
  %v166 = vmul.f32 %v145, %v165
  %168 = vrot.lane.b32.xlu0 %v166, 1
  %v169 = vpop.permute.xlu0 %168
  %v171 = vadd.f32 %v144, %v169
  %v172 = vadd.f32 %v123, %v109
  %v173 = vsel %vm69, %v172, %v171
  %vm174 = vcmask 15360
  %175 = vst.msk [vmem:[%s5] sm:$0xff] %vm174, %v173
  // Predicated region
  $region22: #{doubleconv_forward.4} parent=0 // pred_check
    _
  $region23: #{doubleconv_forward.4} parent=0 // pred_check_branch
    %177 = sbr.rel (0) target = $region25
  $region24: #{doubleconv_forward.4} parent=0 // pred_region
    _
  $region25: #{doubleconv_forward.4} parent=0 // pred_fallthru
    _
  // Predicated region
  $region26: #{doubleconv_forward.4} parent=0 // pred_check
    _
  $region27: #{doubleconv_forward.4} parent=0 // pred_check_branch
    %179 = sbr.rel (0) target = $region29
  $region28: #{doubleconv_forward.4} parent=0 // pred_region
    _
  $region29: #{doubleconv_forward.4} parent=0 // pred_fallthru
    _
  // Predicated region
  $region30: #{doubleconv_forward.4} parent=0 // pred_check
    _
  $region31: #{doubleconv_forward.4} parent=0 // pred_check_branch
    %181 = sbr.rel (0) target = $region33
  $region32: #{doubleconv_forward.4} parent=0 // pred_region
    _
  $region33: #{doubleconv_forward.4} parent=0 // pred_fallthru
    _
  // Predicated region
  $region34: #{doubleconv_forward.4} parent=0 // pred_check
    _
  $region35: #{doubleconv_forward.4} parent=0 // pred_check_branch
    %183 = sbr.rel (0) target = $region37
  $region36: #{doubleconv_forward.4} parent=0 // pred_region
    _
  $region37: #{doubleconv_forward.4} parent=0 // pred_fallthru
    _

</llo_original>
